<compile_context>
chip_gen: v5e
topology: v5e:2x2
jax: 0.10.0
libtpu: 0.0.40
codegen_flags: <defaults>
</compile_context>

<pallas_src>
import jax
import jax.numpy as jnp
from jax.experimental import pallas as pl
from jax.experimental.pallas import tpu as pltpu


# ----------------------------- kernels ------------------------------------- #

def _scl_kernel_bias(x_ref, w_ref, b_ref, o_ref):
    """(TG, TB, Fin) @ (TG, Fin, Fout_p) + (TG, 1, Fout_p) -> (TG, TB, Fout_p)."""
    acc = jnp.einsum('gbk,gkn->gbn', x_ref[...], w_ref[...],
                     preferred_element_type=jnp.float32)
    acc = acc + b_ref[...].astype(jnp.float32)      # broadcast over batch rows
    o_ref[...] = acc.astype(o_ref.dtype)


def _scl_kernel_nobias(x_ref, w_ref, o_ref):
    acc = jnp.einsum('gbk,gkn->gbn', x_ref[...], w_ref[...],
                     preferred_element_type=jnp.float32)
    o_ref[...] = acc.astype(o_ref.dtype)


# --------------------------- tile selection --------------------------------- #

def _round_up(x, m):
    return ((x + m - 1) // m) * m


def _choose_tiles(G, B, Fin, Fout_p, in_bytes, out_bytes, budget):
    """Pick (group tile TG, batch tile block_b) against the VMEM budget."""
    min_tb = B if B <= 8 else 8

    def tiles_bytes(tg, tb):
        x_t = tg * tb * Fin * in_bytes
        w_t = tg * Fin * Fout_p * in_bytes
        b_t = tg * Fout_p * 4
        o_t = tg * tb * Fout_p * out_bytes
        return 2 * (x_t + w_t + b_t + o_t)          # double-buffered pipeline

    # Group tile: amortize per-step overhead when the contraction depth is tiny.
    TG = 1
    if Fin < 128:
        while TG < G and tiles_bytes(TG + 1, min_tb) * 4 <= budget:
            TG += 1
        TG = pl.cdiv(G, pl.cdiv(G, TG))              # balance group tiles

    # Batch tile: largest 8-aligned tile that fits, then balanced (no tiny tail).
    if B <= 8:
        block_b = B
    else:
        tb = min(_round_up(B, 8), 2048)
        while tb > 8 and tiles_bytes(TG, tb) > budget:
            tb -= 8
        block_b = tb
        nb = pl.cdiv(B, block_b)
        block_b = min(_round_up(pl.cdiv(B, nb), 8), block_b)
    return TG, block_b


# ------------------------------ wrapper ------------------------------------- #

def simulated_complex_linear(x, weight, bias=None, *, mxu_dtype=None):
    """
    Args:
      x        : (G, B, Fin)
      weight   : (G, Fout, Fin)   (PyTorch parameter layout)
      bias     : (G, Fout) or None
      mxu_dtype: optional narrower matmul dtype (e.g. jnp.bfloat16); accumulation
                 stays f32.  Default None keeps full input precision.
    Returns:
      y        : (G, B, Fout)
    """
    G, B, Fin = x.shape
    Fout = weight.shape[1]
    out_dtype = x.dtype

    # Lane-dense Fout: pad only the tiny weight/bias tensors; slice output later.
    Fout_p = _round_up(Fout, 128)

    w_t = jnp.transpose(weight, (0, 2, 1))                       # (G, Fin, Fout)
    if Fout_p != Fout:
        w_t = jnp.pad(w_t, ((0, 0), (0, 0), (0, Fout_p - Fout)))

    has_bias = bias is not None
    if has_bias:
        b3 = bias.reshape(G, 1, Fout).astype(jnp.float32)
        if Fout_p != Fout:
            b3 = jnp.pad(b3, ((0, 0), (0, 0), (0, Fout_p - Fout)))

    # Optional bf16 MXU path (x is the only big tensor that gets cast).
    if mxu_dtype is not None:
        x_in = x.astype(mxu_dtype)
        w_in = w_t.astype(mxu_dtype)
    else:
        x_in, w_in = x, w_t

    in_bytes = jnp.dtype(x_in.dtype).itemsize
    out_bytes = jnp.dtype(out_dtype).itemsize

    # Per-generation VMEM budget (v5e/v6e: 128 MiB physical, v7x: 64 MiB per TC).
    try:
        vmem_cap = int(pltpu.get_tpu_info().vmem_capacity_bytes)
    except Exception:
        vmem_cap = 64 * 1024 * 1024
    budget = int(vmem_cap * 0.70)

    TG, block_b = _choose_tiles(G, B, Fin, Fout_p, in_bytes, out_bytes, budget)
    gt = pl.cdiv(G, TG)
    nb = pl.cdiv(B, block_b)

    in_specs = [
        pl.BlockSpec((TG, block_b, Fin), lambda g, b: (g, b, 0)),
        pl.BlockSpec((TG, Fin, Fout_p), lambda g, b: (g, 0, 0)),
    ]
    operands = [x_in, w_in]
    if has_bias:
        in_specs.append(pl.BlockSpec((TG, 1, Fout_p), lambda g, b: (g, 0, 0)))
        operands.append(b3)
        kernel = _scl_kernel_bias
    else:
        kernel = _scl_kernel_nobias

    bytes_accessed = (x_in.size * in_bytes
                      + w_in.size * in_bytes
                      + (b3.size * 4 if has_bias else 0)
                      + G * B * Fout_p * out_bytes)
    cost = pl.CostEstimate(flops=2 * G * B * Fin * Fout_p,
                           transcendentals=0,
                           bytes_accessed=int(bytes_accessed))

    out = pl.pallas_call(
        kernel,
        out_shape=jax.ShapeDtypeStruct((G, B, Fout_p), out_dtype),
        grid_spec=pltpu.PrefetchScalarGridSpec(
            num_scalar_prefetch=0,
            grid=(gt, nb),                    # groups outer: weight tile resident
            in_specs=in_specs,
            out_specs=pl.BlockSpec((TG, block_b, Fout_p), lambda g, b: (g, b, 0)),
        ),
        compiler_params=pltpu.CompilerParams(
            dimension_semantics=("parallel", "parallel"),
            vmem_limit_bytes=budget),
        cost_estimate=cost,
    )(*operands)

    if Fout_p != Fout:
        out = out[:, :, :Fout]
    return out


# ----------------------------- reference ------------------------------------ #

def _reference(x, weight, bias):
    """Pure-JAX reference of the PyTorch forward: bmm(x, W^T) + bias."""
    y = jnp.einsum('gbi,goi->gbo', x, weight)
    if bias is not None:
        y = y + bias[:, None, :]
    return y


if __name__ == "__main__":
    # Small deterministic problem: groups=2, batch=8, in_features=16, out_features=32
    G, B, Fin, Fout = 2, 8, 16, 32

    key = jax.random.PRNGKey(0)
    kx, kw, kb = jax.random.split(key, 3)

    x = jax.random.normal(kx, (G, B, Fin), dtype=jnp.float32)

    # Deterministic param init matching reset_parameters():
    # kaiming_uniform_(a=sqrt(5)) -> bound = 1/sqrt(fan_in); bias bound likewise.
    bound = 1.0 / (Fin ** 0.5)
    weight = jax.random.uniform(kw, (G, Fout, Fin), jnp.float32, -bound, bound)
    bias = jax.random.uniform(kb, (G, Fout), jnp.float32, -bound, bound)

    # With-bias path
    y = simulated_complex_linear(x, weight, bias)
    y = jax.block_until_ready(y)
    y_ref = _reference(x, weight, bias)
    assert y.shape == (G, B, Fout)
    assert jnp.allclose(y, y_ref, atol=1e-5, rtol=1e-5)

    # Bias-less path (dedicated kernel, no bias operand)
    y_nb = jax.block_until_ready(simulated_complex_linear(x, weight, None))
    y_nb_ref = _reference(x, weight, None)
    assert jnp.allclose(y_nb, y_nb_ref, atol=1e-5, rtol=1e-5)

    print("KERNEL_OK")
</pallas_src>

<mosaic_0001>
module attributes {stable_mosaic.version = 11 : i64} {
  func.func @_scl_kernel_bias(%arg0: i32, %arg1: i32, %arg2: memref<2x8x16xf32, #tpu.memory_space<vmem>>, %arg3: memref<2x16x128xf32, #tpu.memory_space<vmem>>, %arg4: memref<2x1x128xf32, #tpu.memory_space<vmem>>, %arg5: memref<2x8x128xf32, #tpu.memory_space<vmem>>) attributes {dimension_semantics = [#tpu.dimension_semantics<parallel>, #tpu.dimension_semantics<parallel>], iteration_bounds = array<i64: 1, 1>, scalar_prefetch = 0 : i64, scratch_operands = 0 : i64, tpu.core_type = #tpu.core_type<tc>, window_params = [{transform_indices = @transform_0, window_bounds = array<i64: 2, 8, 16>}, {transform_indices = @transform_1, window_bounds = array<i64: 2, 16, 128>}, {transform_indices = @transform_2, window_bounds = array<i64: 2, 1, 128>}, {transform_indices = @transform_3, window_bounds = array<i64: 2, 8, 128>}]} {
    %c0 = arith.constant 0 : index
    %c0_0 = arith.constant 0 : index
    %c0_1 = arith.constant 0 : index
    %0 = vector.load %arg2[%c0, %c0_0, %c0_1] : memref<2x8x16xf32, #tpu.memory_space<vmem>>, vector<2x8x16xf32>
    %c0_2 = arith.constant 0 : index
    %c0_3 = arith.constant 0 : index
    %c0_4 = arith.constant 0 : index
    %1 = vector.load %arg3[%c0_2, %c0_3, %c0_4] : memref<2x16x128xf32, #tpu.memory_space<vmem>>, vector<2x16x128xf32>
    "tpu.trace_start"() <{level = 10 : i32, message = "gbk,gkn->gbn"}> : () -> ()
    %cst = arith.constant dense<0.000000e+00> : vector<2x8x128xf32>
    %2 = tpu.matmul %0, %1, %cst {dimension_numbers = #tpu.dot_dimension_numbers<[2], [1], [1], [2], [0, 0, 0, 1, 1, 2], [0], [0]>} : vector<2x8x16xf32>, vector<2x16x128xf32>, vector<2x8x128xf32> -> vector<2x8x128xf32>
    "tpu.trace_stop"() : () -> ()
    %c0_5 = arith.constant 0 : index
    %c0_6 = arith.constant 0 : index
    %c0_7 = arith.constant 0 : index
    %3 = vector.load %arg4[%c0_5, %c0_6, %c0_7] : memref<2x1x128xf32, #tpu.memory_space<vmem>>, vector<2x1x128xf32>
    %4 = vector.broadcast %3 : vector<2x1x128xf32> to vector<2x8x128xf32>
    %5 = arith.addf %2, %4 : vector<2x8x128xf32>
    %c0_8 = arith.constant 0 : index
    %c0_9 = arith.constant 0 : index
    %c0_10 = arith.constant 0 : index
    %6 = vector.load %arg5[%c0_8, %c0_9, %c0_10] : memref<2x8x128xf32, #tpu.memory_space<vmem>>, vector<2x8x128xf32>
    tpu.vector_store %arg5[%c0_8, %c0_9, %c0_10], %5 {strides = array<i32>} : memref<2x8x128xf32, #tpu.memory_space<vmem>>, vector<2x8x128xf32>,
    return
  }
  func.func @transform_0(%arg0: i32, %arg1: i32) -> (i32, i32, i32) {
    %c0_i32 = arith.constant 0 : i32
    %c0_i32_0 = arith.constant 0 : i32
    return %arg0, %arg1, %c0_i32 : i32, i32, i32
  }
  func.func @transform_1(%arg0: i32, %arg1: i32) -> (i32, i32, i32) {
    %c0_i32 = arith.constant 0 : i32
    %c0_i32_0 = arith.constant 0 : i32
    %c0_i32_1 = arith.constant 0 : i32
    return %arg0, %c0_i32, %c0_i32_0 : i32, i32, i32
  }
  func.func @transform_2(%arg0: i32, %arg1: i32) -> (i32, i32, i32) {
    %c0_i32 = arith.constant 0 : i32
    %c0_i32_0 = arith.constant 0 : i32
    %c0_i32_1 = arith.constant 0 : i32
    return %arg0, %c0_i32, %c0_i32_0 : i32, i32, i32
  }
  func.func @transform_3(%arg0: i32, %arg1: i32) -> (i32, i32, i32) {
    %c0_i32 = arith.constant 0 : i32
    %c0_i32_0 = arith.constant 0 : i32
    return %arg0, %arg1, %c0_i32 : i32, i32, i32
  }
}

</mosaic_0001>

<llo_original>
// kernel: tpu_custom_call.1
$region0: #{tpu_custom_call.1}
  #allocation0 [shape = 'u32[]', space=smem, size = 0x4, offset = 0x4, fixed_abs, tag = 'smem constant byte address 0x4 - core index']
  #allocation1 [shape = 'u32[72,128]{1,0:T(1,128)}', space=vmem, size = 0x9000, scoped, tag = 'internal scratch']
  %s0 = inlined_call_operand.hbm [shape: f32[2,8,16], index: 0, kind: input, shape index: {}]
  %s1 = inlined_call_operand.hbm [shape: f32[2,16,128], index: 1, kind: input, shape index: {}]
  %s2 = inlined_call_operand.hbm [shape: f32[2,1,128], index: 2, kind: input, shape index: {}]
  %s3 = inlined_call_operand.hbm [shape: f32[2,8,128], index: 3, kind: output, shape index: {}]
  %s4 = sld [smem:[#allocation0]]
  $region34: #{tpu_custom_call.1} parent=0
    _
  %s6 = ssub.s32 1, %s4
  %s7 = scalar_select 0, %s6, %s4
  $region1: #{tpu_custom_call.1} parent=0
    #allocation2 [shape = 'u8[8192]{0}', space=vmem, size = 0x2000, scoped, tag = 'input window, operand 0, single buffered']
    #allocation3 [shape = 's32[1]{0}', space=sflag, size = 0x4, scoped, tag = 'scoped memory for tpu_custom_call.1']
    #allocation4 [shape = 's32[1]{0}', space=sflag, size = 0x4, scoped, tag = 'scoped memory for tpu_custom_call.1']
    #allocation5 [shape = 'u8[16384]{0}', space=vmem, size = 0x4000, scoped, tag = 'input window, operand 1, single buffered']
    #allocation6 [shape = 's32[1]{0}', space=sflag, size = 0x4, scoped, tag = 'scoped memory for tpu_custom_call.1']
    #allocation7 [shape = 'u8[1024]{0}', space=vmem, size = 0x400, scoped, tag = 'input window, operand 2, single buffered']
    #allocation8 [shape = 'u8[8192]{0}', space=vmem, size = 0x2000, scoped, tag = 'output window, operand 0, single buffered']
    %8 = vsyncpa [#allocation3], 0
    %9 = vsyncpa [#allocation6], 0
    %10 = vsyncpa [#allocation4], 0
    // Predicated region
    $region2: #{tpu_custom_call.1} parent=1 // pred_check
      _
    $region3: #{tpu_custom_call.1} parent=1 // pred_check_branch
      %12 = sbr.rel (0) target = $region5
    $region4: #{tpu_custom_call.1} parent=1 // pred_region
      %14 = vsyncadd [#allocation3], 0
      %s15 = sshll.u32 %s0, 4
      %s16 = int_to_ptr.hbm [resolvable:$true] %s15
      %s17 = sshll.u32 [#allocation2], 4
      %s18 = int_to_ptr.vmem [resolvable:$true] %s17
      %23 = dma.hbm_to_vmem [thread:$0]  %s16, 256, %s18, [#allocation3], 128, 128, 8
    $region5: #{tpu_custom_call.1} parent=1 // pred_fallthru
      _
    // Predicated region
    $region6: #{tpu_custom_call.1} parent=1 // pred_check
      _
    $region7: #{tpu_custom_call.1} parent=1 // pred_check_branch
      %25 = sbr.rel (0) target = $region9
    $region8: #{tpu_custom_call.1} parent=1 // pred_region
      %27 = vsyncadd [#allocation6], 0
      %s28 = sshll.u32 %s1, 4
      %s29 = int_to_ptr.hbm [resolvable:$true] %s28
      %s30 = sshll.u32 [#allocation5], 4
      %s31 = int_to_ptr.vmem [resolvable:$true] %s30
      %36 = dma.hbm_to_vmem [thread:$0]  %s29, 512, %s31, [#allocation6], 128, 128, 8
    $region9: #{tpu_custom_call.1} parent=1 // pred_fallthru
      _
    // Predicated region
    $region10: #{tpu_custom_call.1} parent=1 // pred_check
      _
    $region11: #{tpu_custom_call.1} parent=1 // pred_check_branch
      %38 = sbr.rel (0) target = $region13
    $region12: #{tpu_custom_call.1} parent=1 // pred_region
      %40 = vsyncadd [#allocation6], 0
      %s41 = sshll.u32 %s2, 4
      %s42 = int_to_ptr.hbm [resolvable:$true] %s41
      %s43 = sshll.u32 [#allocation7], 4
      %s44 = int_to_ptr.vmem [resolvable:$true] %s43
      %49 = dma.hbm_to_vmem [thread:$0]  %s42, 32, %s44, [#allocation6], 16, 16, 1
    $region13: #{tpu_custom_call.1} parent=1 // pred_fallthru
      _
    // Predicated region
    $region14: #{tpu_custom_call.1} parent=1 // pred_check
      _
    $region15: #{tpu_custom_call.1} parent=1 // pred_check_branch
      %51 = sbr.rel (0) target = $region17
    $region16: #{tpu_custom_call.1} parent=1 // pred_region
      %53 = dma.done [#allocation3], 256
    $region17: #{tpu_custom_call.1} parent=1 // pred_fallthru
      _
    // Predicated region
    $region18: #{tpu_custom_call.1} parent=1 // pred_check
      _
    $region19: #{tpu_custom_call.1} parent=1 // pred_check_branch
      %55 = sbr.rel (0) target = $region21
    $region20: #{tpu_custom_call.1} parent=1 // pred_region
      %57 = dma.done [#allocation6], 512
    $region21: #{tpu_custom_call.1} parent=1 // pred_fallthru
      _
    // Predicated region
    $region22: #{tpu_custom_call.1} parent=1 // pred_check
      _
    $region23: #{tpu_custom_call.1} parent=1 // pred_check_branch
      %59 = sbr.rel (0) target = $region25
    $region24: #{tpu_custom_call.1} parent=1 // pred_region
      %61 = dma.done [#allocation6], 32
    $region25: #{tpu_custom_call.1} parent=1 // pred_fallthru
      _
    %v62 = vld [vmem:[#allocation2] sm:$0xff]
    %v63 = vld [vmem:[#allocation2 + $0x8] sm:$0xff]
    %v64 = vld [vmem:[#allocation5] sm:$0xff]
    %v65 = vld [vmem:[#allocation5 + $0x8] sm:$0xff]
    %v66 = vld [vmem:[#allocation5 + $0x10] sm:$0xff]
    %v67 = vld [vmem:[#allocation5 + $0x18] sm:$0xff]
    %v68 = vld [vmem:[#allocation7] sm:$0x1]
    %v69 = vld [vmem:[#allocation7 + $0x1] sm:$0x1]
    %v72 = vperm.slane %v68, 0
    %v73 = vperm.slane %v69, 0
    %vm76 = vcmask 130048
    %v78 = vsel %vm76, %v62, 0
    %80 = vmatpush.msra.mxu0 0.0
    %81 = vmatpush.msra.mxu0 0.0
    %82 = vmatpush.msra.mxu0 0.0
    %83 = vmatpush.msra.mxu0 0.0
    %84 = vmatpush.msra.mxu0 0.0
    %85 = vmatpush.msra.mxu0 0.0
    %86 = vmatpush.msra.mxu0 0.0
    %87 = vmatpush.msra.mxu0 0.0
    %88 = vmatpush.msra.mxu0 0.0
    %89 = vmatpush.msra.mxu0 0.0
    %90 = vmatpush.msra.mxu0 0.0
    %91 = vmatpush.msra.mxu0 0.0
    %92 = vmatpush.msra.mxu0 0.0
    %93 = vmatpush.msra.mxu0 0.0
    %94 = vmatpush.msra.mxu0 %v65
    %95 = vmatpush.msra.mxu0 %v64
    %96 = vmatmul.f32.gmra.mxu0 %v78
    %v97 = vpop.f32.mrf.mxu0
    %v98 = vadd.f32 %v72, %v97
    %99 = vdwg.mxu0
    %v101 = vsel %vm76, %v63, 0
    %103 = vmatpush.msra.mxu0 0.0
    %104 = vmatpush.msra.mxu0 0.0
    %105 = vmatpush.msra.mxu0 0.0
    %106 = vmatpush.msra.mxu0 0.0
    %107 = vmatpush.msra.mxu0 0.0
    %108 = vmatpush.msra.mxu0 0.0
    %109 = vmatpush.msra.mxu0 0.0
    %110 = vmatpush.msra.mxu0 0.0
    %111 = vmatpush.msra.mxu0 0.0
    %112 = vmatpush.msra.mxu0 0.0
    %113 = vmatpush.msra.mxu0 0.0
    %114 = vmatpush.msra.mxu0 0.0
    %115 = vmatpush.msra.mxu0 0.0
    %116 = vmatpush.msra.mxu0 0.0
    %117 = vmatpush.msra.mxu0 %v67
    %118 = vmatpush.msra.mxu0 %v66
    %119 = vmatmul.f32.gmra.mxu0 %v101
    %v120 = vpop.f32.mrf.mxu0
    %v121 = vadd.f32 %v73, %v120
    %122 = vdwg.mxu0
    %123 = vst [vmem:[#allocation8] sm:$0xff] %v98
    %124 = vst [vmem:[#allocation8 + $0x8] sm:$0xff] %v121
    // Predicated region
    $region26: #{tpu_custom_call.1} parent=1 // pred_check
      _
    $region27: #{tpu_custom_call.1} parent=1 // pred_check_branch
      %126 = sbr.rel (0) target = $region29
    $region28: #{tpu_custom_call.1} parent=1 // pred_region
      %128 = vsyncadd [#allocation4], 0
      %s129 = sshll.u32 [#allocation8], 4
      %s130 = int_to_ptr.vmem [resolvable:$true] %s129
      %s131 = sshll.u32 %s3, 4
      %s132 = int_to_ptr.hbm [resolvable:$true] %s131
      %137 = dma.vmem_to_hbm [thread:$0]  %s130, 256, %s132, [#allocation4], 128, 128, 8
    $region29: #{tpu_custom_call.1} parent=1 // pred_fallthru
      _
    // Predicated region
    $region30: #{tpu_custom_call.1} parent=1 // pred_check
      _
    $region31: #{tpu_custom_call.1} parent=1 // pred_check_branch
      %139 = sbr.rel (0) target = $region33
    $region32: #{tpu_custom_call.1} parent=1 // pred_region
      %141 = dma.done [#allocation4], 256
    $region33: #{tpu_custom_call.1} parent=1 // pred_fallthru
      _
    %142 = vsyncpa [#allocation3], 1
    %143 = vsyncpa [#allocation6], 1
    %144 = vsyncpa [#allocation4], 1

</llo_original>
